<compile_context>
chip_gen: v7x
topology: tpu7x:2x2x1
jax: 0.10.0
libtpu: 0.0.40
codegen_flags: <defaults>
</compile_context>

<pallas_src>
import functools

import jax
import jax.numpy as jnp
from jax.experimental import pallas as pl
from jax.experimental.pallas import tpu as pltpu


def _round_up(v, m):
    return -(-v // m) * m


def _vmem_params():
    """(per-step tile budget bytes, vmem_limit_bytes) — generation aware."""
    cap = 64 << 20
    try:
        cap = int(pltpu.get_tpu_info().vmem_capacity_bytes)
    except Exception:
        pass
    kind = ""
    try:
        kind = jax.devices()[0].device_kind.lower()
    except Exception:
        pass
    if ("v5 lite" in kind) or ("v5e" in kind) or ("v5lite" in kind):
        # v5e: this kernel is EUP-bound there; modest tiles suffice and the
        # default scoped VMEM is only 16 MiB.
        return 12 << 20, 24 << 20
    budget = min(24 << 20, cap // 3)           # ~24 MiB v6e, ~21 MiB v7x
    limit = int(min(cap - (16 << 20), max(48 << 20, 3 * budget)))
    return budget, limit


def _choose_tile_hw(hw, cn, co, itemsize, budget, cap=32768):
    """Largest 128-multiple spatial tile whose double-buffered inputs plus f32
    intermediates fit the per-step VMEM budget."""
    hw_128 = _round_up(hw, 128)
    # per-lane bytes: 2x-buffered native-dtype inputs + ~2.5x f32 intermediates
    # (x/e over Cn; t/t_e/shifted over Co) + a handful of (1, T) f32 rows.
    per_lane = (cn + co) * (2 * itemsize + 10) + 64
    tile = min(cap, hw_128, max(128, budget // per_lane))
    return max(128, (tile // 128) * 128)


def _ukd_kernel(x_ref, t_ref, *rest, alpha, n_old, hw, tile_hw,
                has_mask, reduce_out, accumulate, lane_mask_needed):
    """Per-(batch, spatial-tile) unbiased KD loss.

    x_ref : (1, Cn, T)  new-model logits
    t_ref : (1, Co, T)  old-model logits
    rest  : optional mask ref (1, 1, T), then the output ref:
              reduce_out & accumulate : (1, 1, 128) per-batch running sum
              reduce_out & !accumulate: (1, 1, 1, 128) per-tile partial sum
              'none'                  : (1, 1, T) negated per-pixel loss
    """
    if has_mask:
        mask_ref, out_ref = rest
    else:
        (out_ref,) = rest

    x = x_ref[0].astype(jnp.float32)              # (Cn, T)
    t = t_ref[0].astype(jnp.float32)              # (Co, T)
    if alpha != 1.0:
        t = t * alpha
    cn = x.shape[0]
    co = n_old

    # --- logsumexp over all channels; reuse exp(x - m_all) for both LSEs. ---
    m_all = jnp.max(x, axis=0, keepdims=True)                       # (1, T)
    e = jnp.exp(x - m_all)                                          # (Cn, T)
    den_sum = jnp.sum(e, axis=0, keepdims=True)                     # (1, T)
    log_den = jnp.log(den_sum)                                      # den - m_all

    # background LSE over channels {0} U [co, Cn): iota mask, no concatenate.
    ch = jax.lax.broadcasted_iota(jnp.int32, (cn, 1), 0)
    bkg_sel = jnp.logical_or(ch == 0, ch >= co)                     # (Cn, 1)
    bkg_sum = jnp.sum(jnp.where(bkg_sel, e, 0.0), axis=0, keepdims=True)
    # Clamp so total exp-underflow of every background channel gives a large
    # negative out_bkg instead of -inf (which would turn into NaN downstream).
    bkg_sum = jnp.maximum(bkg_sum, jnp.finfo(jnp.float32).tiny)
    out_bkg = jnp.log(bkg_sum) - log_den                            # (1, T)

    # --- unnormalized softmax weights of the old-model logits. ---
    t_m = jnp.max(t, axis=0, keepdims=True)
    t_e = jnp.exp(t - t_m)                                          # (Co, T)
    t_sum = jnp.sum(t_e, axis=0, keepdims=True)                     # (1, T)

    # foreground: sum over ALL Co rows, then patch row 0 algebraically
    # (removes the (Co, T) iota + select pass on the VPU).
    shifted = x[:co, :] - (m_all + log_den)                         # (Co, T)
    fg_all = jnp.sum(t_e * shifted, axis=0, keepdims=True)          # (1, T)
    weighted = t_e[0:1, :] * (out_bkg - shifted[0:1, :]) + fg_all   # (1, T)

    inv_den = pl.reciprocal(t_sum, approx=False)                    # exact: VALU
    loss = weighted * inv_den * (1.0 / co)                          # (1, T)

    if has_mask:
        loss = loss * mask_ref[0].astype(jnp.float32)

    if reduce_out:
        if lane_mask_needed:
            # zero ragged/garbage lanes of the last spatial tile BEFORE summing
            lane = jax.lax.broadcasted_iota(jnp.int32, (1, tile_hw), 1)
            valid = (pl.program_id(1) * tile_hw + lane) < hw
            loss = jnp.where(valid, loss, 0.0)
        partial = jnp.sum(loss, axis=1, keepdims=True)              # (1, 1)
        col = jax.lax.broadcasted_iota(jnp.int32, (1, 128), 1)
        contrib = jnp.where(col == 0, partial, 0.0)                 # (1, 128)
        if accumulate:
            # output block is resident across the (arbitrary) spatial axis
            @pl.when(pl.program_id(1) == 0)
            def _():
                out_ref[...] = jnp.zeros_like(out_ref)
            out_ref[0] = out_ref[0] + contrib
        else:
            out_ref[0, 0] = contrib
    else:
        out_ref[0] = -loss    # ragged-tile OOB lanes dropped by Pallas on store


def unbiased_kd_loss(inputs, targets, mask=None, reduction="mean", alpha=1.0,
                     tile_hw_override=None):
    """JAX/Pallas equivalent of UnbiasedKnowledgeDistillationLoss.forward.

    inputs : (B, Cn, H, W)  -- Cn = old classes + new classes
    targets: (B, Co, H, W)  -- Co < Cn
    mask   : optional (B, H, W)
    """
    B, Cn, H, W = inputs.shape
    Co = targets.shape[1]
    assert Cn > Co, "inputs must have more channels than targets (new_cl >= 1)"
    HW = H * W

    x = inputs.reshape(B, Cn, HW)     # keep native dtype; cast in-kernel
    t = targets.reshape(B, Co, HW)

    budget, vmem_limit = _vmem_params()
    itemsize = max(x.dtype.itemsize, t.dtype.itemsize)
    if tile_hw_override is not None:
        tile_hw = max(128, (int(tile_hw_override) // 128) * 128)
    else:
        tile_hw = _choose_tile_hw(HW, Cn, Co, itemsize, budget)
    num_tiles = -(-HW // tile_hw)
    ragged = (HW % tile_hw) != 0

    has_mask = mask is not None
    operands = [x, t]
    in_specs = [
        pl.BlockSpec((1, Cn, tile_hw), lambda b, s: (b, 0, s)),
        pl.BlockSpec((1, Co, tile_hw), lambda b, s: (b, 0, s)),
    ]
    if has_mask:
        m = mask.reshape(B, 1, HW)
        if m.dtype == jnp.bool_:
            m = m.astype(jnp.int8)    # narrow DMA; cast to f32 in-kernel
        operands.append(m)
        in_specs.append(pl.BlockSpec((1, 1, tile_hw), lambda b, s: (b, 0, s)))

    reduce_out = reduction in ("mean", "sum")
    accumulate = reduce_out and B >= 2
    if reduce_out:
        if accumulate:
            # per-batch resident accumulator; spatial axis must be sequential
            out_shape = jax.ShapeDtypeStruct((B, 1, 128), jnp.float32)
            out_specs = pl.BlockSpec((1, 1, 128), lambda b, s: (b, 0, 0))
            dim_sem = ("parallel", "arbitrary")
        else:
            # B == 1: keep spatial axis parallel (v7x megacore), per-tile partials
            out_shape = jax.ShapeDtypeStruct((B, num_tiles, 1, 128), jnp.float32)
            out_specs = pl.BlockSpec((1, 1, 1, 128), lambda b, s: (b, s, 0, 0))
            dim_sem = ("parallel", "parallel")
    else:
        out_shape = jax.ShapeDtypeStruct((B, 1, HW), jnp.float32)
        out_specs = pl.BlockSpec((1, 1, tile_hw), lambda b, s: (b, 0, s))
        dim_sem = ("parallel", "parallel")

    kernel = functools.partial(
        _ukd_kernel, alpha=float(alpha), n_old=Co, hw=HW, tile_hw=tile_hw,
        has_mask=has_mask, reduce_out=reduce_out, accumulate=accumulate,
        lane_mask_needed=ragged)

    bytes_accessed = sum(int(op.size) * op.dtype.itemsize for op in operands)
    bytes_accessed += int(out_shape.size) * 4
    transcendentals = B * HW * (Cn + Co + 3)
    flops = B * HW * 6 * (Cn + Co)

    out = pl.pallas_call(
        kernel,
        out_shape=out_shape,
        grid_spec=pltpu.PrefetchScalarGridSpec(
            num_scalar_prefetch=0,
            grid=(B, num_tiles),
            in_specs=in_specs,
            out_specs=out_specs,
        ),
        compiler_params=pltpu.CompilerParams(
            dimension_semantics=dim_sem,
            vmem_limit_bytes=int(vmem_limit)),
        cost_estimate=pl.CostEstimate(
            flops=int(flops),
            transcendentals=int(transcendentals),
            bytes_accessed=int(bytes_accessed)),
    )(*operands)

    if reduction == "mean":
        return -jnp.sum(out) / (B * H * W)
    elif reduction == "sum":
        return -jnp.sum(out)
    # 'none': kernel already applied mask and negation.
    return out[:, 0, :].reshape(B, H, W)


def _reference_jax(inputs, targets, mask=None, reduction="mean", alpha=1.0):
    """Pure-JAX reference mirroring the PyTorch forward (for validation)."""
    inputs = inputs.astype(jnp.float32)
    targets = targets.astype(jnp.float32) * alpha
    new_cl = inputs.shape[1] - targets.shape[1]
    co = targets.shape[1]
    idx = jnp.array([0] + list(range(co, inputs.shape[1])), dtype=jnp.int32)
    den = jax.scipy.special.logsumexp(inputs, axis=1)                 # (B,H,W)
    out_no_bkg = inputs[:, 1:-new_cl] - den[:, None]                  # (B,Co-1,H,W)
    out_bkg = jax.scipy.special.logsumexp(
        jnp.take(inputs, idx, axis=1), axis=1) - den                  # (B,H,W)
    labels = jax.nn.softmax(targets, axis=1)                          # (B,Co,H,W)
    loss = (labels[:, 0] * out_bkg
            + jnp.sum(labels[:, 1:] * out_no_bkg, axis=1)) / co
    if mask is not None:
        loss = loss * mask.astype(jnp.float32)
    if reduction == "mean":
        return -jnp.mean(loss)
    elif reduction == "sum":
        return -jnp.sum(loss)
    return -loss


if __name__ == "__main__":
    key = jax.random.PRNGKey(0)
    k1, k2, k3 = jax.random.split(key, 3)
    B, Co, new_cl, H, W = 2, 6, 2, 16, 16
    Cn = Co + new_cl

    inputs = jax.random.normal(k1, (B, Cn, H, W), dtype=jnp.float32)
    targets = jax.random.normal(k2, (B, Co, H, W), dtype=jnp.float32)
    maskf = (jax.random.uniform(k3, (B, H, W)) > 0.3).astype(jnp.float32)
    maskb = maskf.astype(jnp.bool_)

    # 1) mean, no mask (B>=2 -> per-batch accumulator path)
    out = jax.block_until_ready(unbiased_kd_loss(inputs, targets, reduction="mean"))
    ref = jax.block_until_ready(_reference_jax(inputs, targets, reduction="mean"))
    assert jnp.allclose(out, ref, rtol=1e-5, atol=1e-5), (out, ref)

    # 2) sum, with float mask (fused mask + reduction)
    out = jax.block_until_ready(
        unbiased_kd_loss(inputs, targets, mask=maskf, reduction="sum"))
    ref = jax.block_until_ready(
        _reference_jax(inputs, targets, mask=maskf, reduction="sum"))
    assert jnp.allclose(out, ref, rtol=1e-5, atol=1e-4), (out, ref)

    # 3) bool mask (narrow int8 DMA path), mean
    out = jax.block_until_ready(
        unbiased_kd_loss(inputs, targets, mask=maskb, reduction="mean"))
    ref = jax.block_until_ready(
        _reference_jax(inputs, targets, mask=maskf, reduction="mean"))
    assert jnp.allclose(out, ref, rtol=1e-5, atol=1e-5), (out, ref)

    # 4) 'none', with mask (per-pixel loss map path)
    out = jax.block_until_ready(
        unbiased_kd_loss(inputs, targets, mask=maskf, reduction="none"))
    ref = jax.block_until_ready(
        _reference_jax(inputs, targets, mask=maskf, reduction="none"))
    assert jnp.allclose(out, ref, rtol=1e-4, atol=1e-5)

    # 5) non-128-multiple spatial extent, no pad (ragged last block + lane mask)
    H2, W2 = 10, 13
    i2 = jax.random.normal(k1, (B, Cn, H2, W2), dtype=jnp.float32)
    t2 = jax.random.normal(k2, (B, Co, H2, W2), dtype=jnp.float32)
    out = jax.block_until_ready(unbiased_kd_loss(i2, t2, reduction="mean", alpha=2.0))
    ref = jax.block_until_ready(_reference_jax(i2, t2, reduction="mean", alpha=2.0))
    assert jnp.allclose(out, ref, rtol=1e-5, atol=1e-5), (out, ref)

    # 6) multi-tile accumulation across a ragged grid (forced small tile)
    out = jax.block_until_ready(
        unbiased_kd_loss(i2, t2, reduction="mean", tile_hw_override=128))
    ref = jax.block_until_ready(_reference_jax(i2, t2, reduction="mean"))
    assert jnp.allclose(out, ref, rtol=1e-5, atol=1e-5), (out, ref)

    # 7) multi-tile 'none' path (ragged OOB stores dropped by Pallas)
    out = jax.block_until_ready(
        unbiased_kd_loss(i2, t2, reduction="none", tile_hw_override=128))
    ref = jax.block_until_ready(_reference_jax(i2, t2, reduction="none"))
    assert jnp.allclose(out, ref, rtol=1e-4, atol=1e-5)

    # 8) B == 1 (per-tile partials path, spatial axis kept parallel)
    out = jax.block_until_ready(
        unbiased_kd_loss(inputs[:1], targets[:1], reduction="mean"))
    ref = jax.block_until_ready(
        _reference_jax(inputs[:1], targets[:1], reduction="mean"))
    assert jnp.allclose(out, ref, rtol=1e-5, atol=1e-5), (out, ref)

    # 9) bf16 inputs DMA'd natively (no wrapper f32 pre-cast)
    ib = inputs.astype(jnp.bfloat16)
    tb = targets.astype(jnp.bfloat16)
    out = jax.block_until_ready(unbiased_kd_loss(ib, tb, reduction="mean"))
    ref = jax.block_until_ready(_reference_jax(ib, tb, reduction="mean"))
    assert jnp.allclose(out, ref, rtol=1e-5, atol=1e-5), (out, ref)

    print("KERNEL_OK")
</pallas_src>

<mosaic_0001>
module attributes {stable_mosaic.version = 11 : i64} {
  func.func @_ukd_kernel(%arg0: i32, %arg1: i32, %arg2: memref<1x8x256xf32, #tpu.memory_space<vmem>>, %arg3: memref<1x6x256xf32, #tpu.memory_space<vmem>>, %arg4: memref<1x1x128xf32, #tpu.memory_space<vmem>>) attributes {dimension_semantics = [#tpu.dimension_semantics<parallel>, #tpu.dimension_semantics<arbitrary>], iteration_bounds = array<i64: 2, 1>, scalar_prefetch = 0 : i64, scratch_operands = 0 : i64, tpu.core_type = #tpu.core_type<tc>, window_params = [{transform_indices = @transform_0, window_bounds = array<i64: 1, 8, 256>}, {transform_indices = @transform_1, window_bounds = array<i64: 1, 6, 256>}, {transform_indices = @transform_2, window_bounds = array<i64: 1, 1, 128>}]} {
    %c0 = arith.constant 0 : index
    %c0_0 = arith.constant 0 : index
    %c0_1 = arith.constant 0 : index
    %0 = vector.load %arg2[%c0, %c0_0, %c0_1] : memref<1x8x256xf32, #tpu.memory_space<vmem>>, vector<1x8x256xf32>
    %1 = vector.shape_cast %0 : vector<1x8x256xf32> to vector<8x256xf32>
    %c0_2 = arith.constant 0 : index
    %c0_3 = arith.constant 0 : index
    %c0_4 = arith.constant 0 : index
    %2 = vector.load %arg3[%c0_2, %c0_3, %c0_4] : memref<1x6x256xf32, #tpu.memory_space<vmem>>, vector<1x6x256xf32>
    %3 = vector.shape_cast %2 : vector<1x6x256xf32> to vector<6x256xf32>
    %cst = arith.constant dense<0xFF800000> : vector<256xf32>
    %4 = vector.multi_reduction <maximumf>, %1, %cst [0] : vector<8x256xf32> to vector<256xf32>
    %5 = vector.shape_cast %4 : vector<256xf32> to vector<1x256xf32>
    %6 = vector.broadcast %5 : vector<1x256xf32> to vector<8x256xf32>
    %7 = arith.subf %1, %6 : vector<8x256xf32>
    %8 = math.exp %7 : vector<8x256xf32>
    %cst_5 = arith.constant dense<0.000000e+00> : vector<256xf32>
    %9 = vector.multi_reduction <add>, %8, %cst_5 [0] : vector<8x256xf32> to vector<256xf32>
    %10 = vector.shape_cast %9 : vector<256xf32> to vector<1x256xf32>
    %11 = math.log %10 : vector<1x256xf32>
    %12 = tpu.iota {dimensions = array<i32: 0>} : vector<8x1xi32>
    %c0_i32 = arith.constant 0 : i32
    %13 = vector.broadcast %c0_i32 : i32 to vector<8x1xi32>
    %14 = arith.cmpi eq, %12, %13 : vector<8x1xi32>
    %c6_i32 = arith.constant 6 : i32
    %15 = vector.broadcast %c6_i32 : i32 to vector<8x1xi32>
    %16 = arith.cmpi sge, %12, %15 : vector<8x1xi32>
    %17 = arith.ori %14, %16 : vector<8x1xi1>
    %cst_6 = arith.constant 0.000000e+00 : f32
    %18 = vector.shape_cast %17 : vector<8x1xi1> to vector<8x1xi1>
    %19 = vector.broadcast %18 : vector<8x1xi1> to vector<8x256xi1>
    %20 = vector.broadcast %cst_6 : f32 to vector<8x256xf32>
    %21 = arith.select %19, %8, %20 : vector<8x256xi1>, vector<8x256xf32>
    %cst_7 = arith.constant dense<0.000000e+00> : vector<256xf32>
    %22 = vector.multi_reduction <add>, %21, %cst_7 [0] : vector<8x256xf32> to vector<256xf32>
    %23 = vector.shape_cast %22 : vector<256xf32> to vector<1x256xf32>
    %cst_8 = arith.constant 1.17549435E-38 : f32
    %24 = vector.broadcast %cst_8 : f32 to vector<1x256xf32>
    %25 = arith.maximumf %23, %24 : vector<1x256xf32>
    %26 = math.log %25 : vector<1x256xf32>
    %27 = arith.subf %26, %11 : vector<1x256xf32>
    %cst_9 = arith.constant dense<0xFF800000> : vector<256xf32>
    %28 = vector.multi_reduction <maximumf>, %3, %cst_9 [0] : vector<6x256xf32> to vector<256xf32>
    %29 = vector.shape_cast %28 : vector<256xf32> to vector<1x256xf32>
    %30 = vector.broadcast %29 : vector<1x256xf32> to vector<6x256xf32>
    %31 = arith.subf %3, %30 : vector<6x256xf32>
    %32 = math.exp %31 : vector<6x256xf32>
    %cst_10 = arith.constant dense<0.000000e+00> : vector<256xf32>
    %33 = vector.multi_reduction <add>, %32, %cst_10 [0] : vector<6x256xf32> to vector<256xf32>
    %34 = vector.shape_cast %33 : vector<256xf32> to vector<1x256xf32>
    %35 = vector.extract_strided_slice %1 {offsets = [0, 0], sizes = [6, 256], strides = [1, 1]} : vector<8x256xf32> to vector<6x256xf32>
    %36 = arith.addf %5, %11 : vector<1x256xf32>
    %37 = vector.broadcast %36 : vector<1x256xf32> to vector<6x256xf32>
    %38 = arith.subf %35, %37 : vector<6x256xf32>
    %39 = arith.mulf %32, %38 : vector<6x256xf32>
    %cst_11 = arith.constant dense<0.000000e+00> : vector<256xf32>
    %40 = vector.multi_reduction <add>, %39, %cst_11 [0] : vector<6x256xf32> to vector<256xf32>
    %41 = vector.shape_cast %40 : vector<256xf32> to vector<1x256xf32>
    %42 = vector.extract_strided_slice %32 {offsets = [0, 0], sizes = [1, 256], strides = [1, 1]} : vector<6x256xf32> to vector<1x256xf32>
    %43 = vector.extract_strided_slice %38 {offsets = [0, 0], sizes = [1, 256], strides = [1, 1]} : vector<6x256xf32> to vector<1x256xf32>
    %44 = arith.subf %27, %43 : vector<1x256xf32>
    %45 = arith.mulf %42, %44 : vector<1x256xf32>
    %46 = arith.addf %45, %41 : vector<1x256xf32>
    %47 = tpu.reciprocal %34 : vector<1x256xf32> -> vector<1x256xf32>
    %48 = arith.mulf %46, %47 : vector<1x256xf32>
    %cst_12 = arith.constant 0.166666672 : f32
    %49 = vector.broadcast %cst_12 : f32 to vector<1x256xf32>
    %50 = arith.mulf %48, %49 : vector<1x256xf32>
    %cst_13 = arith.constant dense<0.000000e+00> : vector<1xf32>
    %51 = vector.multi_reduction <add>, %50, %cst_13 [1] : vector<1x256xf32> to vector<1xf32>
    %52 = vector.shape_cast %51 : vector<1xf32> to vector<1x1xf32>
    %53 = tpu.iota {dimensions = array<i32: 1>} : vector<1x128xi32>
    %c0_i32_14 = arith.constant 0 : i32
    %54 = vector.broadcast %c0_i32_14 : i32 to vector<1x128xi32>
    %55 = arith.cmpi eq, %53, %54 : vector<1x128xi32>
    %cst_15 = arith.constant 0.000000e+00 : f32
    %56 = vector.shape_cast %52 : vector<1x1xf32> to vector<1x1xf32>
    %57 = vector.broadcast %56 : vector<1x1xf32> to vector<1x128xf32>
    %58 = vector.broadcast %cst_15 : f32 to vector<1x128xf32>
    %59 = arith.select %55, %57, %58 : vector<1x128xi1>, vector<1x128xf32>
    %c0_i32_16 = arith.constant 0 : i32
    %60 = arith.cmpi eq, %arg1, %c0_i32_16 : i32
    %61 = arith.extui %60 : i1 to i32
    %c0_i32_17 = arith.constant 0 : i32
    %62 = arith.cmpi ne, %61, %c0_i32_17 : i32
    scf.if %62 {
      %cst_24 = arith.constant 0.000000e+00 : f32
      %69 = vector.broadcast %cst_24 : f32 to vector<1x1x128xf32>
      %c0_25 = arith.constant 0 : index
      %c0_26 = arith.constant 0 : index
      %c0_27 = arith.constant 0 : index
      %70 = vector.load %arg4[%c0_25, %c0_26, %c0_27] : memref<1x1x128xf32, #tpu.memory_space<vmem>>, vector<1x1x128xf32>
      tpu.vector_store %arg4[%c0_25, %c0_26, %c0_27], %69 {strides = array<i32>} : memref<1x1x128xf32, #tpu.memory_space<vmem>>, vector<1x1x128xf32>,
    } else {
    }
    %c0_18 = arith.constant 0 : index
    %c0_19 = arith.constant 0 : index
    %c0_20 = arith.constant 0 : index
    %63 = vector.load %arg4[%c0_18, %c0_19, %c0_20] : memref<1x1x128xf32, #tpu.memory_space<vmem>>, vector<1x1x128xf32>
    %64 = vector.shape_cast %63 : vector<1x1x128xf32> to vector<1x128xf32>
    %65 = arith.addf %64, %59 : vector<1x128xf32>
    %c0_21 = arith.constant 0 : index
    %c0_22 = arith.constant 0 : index
    %c0_23 = arith.constant 0 : index
    %66 = vector.load %arg4[%c0_21, %c0_22, %c0_23] : memref<1x1x128xf32, #tpu.memory_space<vmem>>, vector<1x1x128xf32>
    %67 = vector.shape_cast %66 : vector<1x1x128xf32> to vector<1x128xf32>
    %68 = vector.shape_cast %65 : vector<1x128xf32> to vector<1x1x128xf32>
    tpu.vector_store %arg4[%c0_21, %c0_22, %c0_23], %68 {strides = array<i32>} : memref<1x1x128xf32, #tpu.memory_space<vmem>>, vector<1x1x128xf32>,
    return
  }
  func.func @transform_0(%arg0: i32, %arg1: i32) -> (i32, i32, i32) {
    %c0_i32 = arith.constant 0 : i32
    %c0_i32_0 = arith.constant 0 : i32
    return %arg0, %c0_i32, %arg1 : i32, i32, i32
  }
  func.func @transform_1(%arg0: i32, %arg1: i32) -> (i32, i32, i32) {
    %c0_i32 = arith.constant 0 : i32
    %c0_i32_0 = arith.constant 0 : i32
    return %arg0, %c0_i32, %arg1 : i32, i32, i32
  }
  func.func @transform_2(%arg0: i32, %arg1: i32) -> (i32, i32, i32) {
    %c0_i32 = arith.constant 0 : i32
    %c0_i32_0 = arith.constant 0 : i32
    %c0_i32_1 = arith.constant 0 : i32
    return %arg0, %c0_i32, %c0_i32_0 : i32, i32, i32
  }
}

</mosaic_0001>

<llo_original>
// kernel: tpu_custom_call.1
$region0: #{tpu_custom_call.1}
  #allocation0 [shape = 'u32[]', space=smem, size = 0x4, offset = 0x4, fixed_abs, tag = 'smem constant byte address 0x4 - core index']
  #allocation1 [shape = 'u32[144,128]{1,0:T(1,128)}', space=vmem, size = 0x12000, scoped, tag = 'internal scratch']
  %s0 = inlined_call_operand.vmem [shape: f32[2,8,256], index: 0, kind: input, shape index: {}]
  %s1 = inlined_call_operand.vmem [shape: f32[2,6,256], index: 1, kind: input, shape index: {}]
  %s2 = inlined_call_operand.hbm [shape: f32[2,1,128], index: 2, kind: output, shape index: {}]
  %s3 = sld [smem:[#allocation0]]
  $region45: #{tpu_custom_call.1} parent=0
    _
  %s5 = ssub.s32 1, %s3
  %s6 = scalar_select 0, %s5, %s3
  $region1: #{tpu_custom_call.1} parent=0
    #allocation2 [shape = 'u8[1024]{0}', space=vmem, size = 0x400, scoped, tag = 'output window, operand 0']
    #allocation3 [shape = 's32[2]{0}', space=sflag, size = 0x8, scoped, tag = 'scoped memory for tpu_custom_call.1']
    %7 = vsyncpa [#allocation3], 0
    %s8 = scalar_lea.sflag [#allocation3], 1
    %9 = vsyncpa %s8, 0
    loop: start=0, step=1, limit=4
    $region2: #{tpu_custom_call.1} parent=1 // loop_pre_header
      _
    $region3: #{tpu_custom_call.1} parent=1 // loop_header
      %s11 = sphi 0, %s15
      %p12 = scmp.ge.s32.totalorder %s11, 4
      %s18 = sphi 0, %s30
      %s19 = sphi 0, %s26
      %s20 = sphi 0, %s18
      %s21 = sphi 0, %s19
      %s22 = sphi 0, %s20
      %s23 = sphi 0, %s21
      %s35 = sphi 0, %s37
      %s38 = sphi 0, %s35
      %s39 = sphi 0, %s38
      %s55 = sphi 0, %s39
      %s63 = sphi 0, %s65
      %s66 = sphi 0, %s63
      %s67 = sphi 0, %s66
      %s83 = sphi 0, %s67
      %s89 = sphi 0, %s91
      %s92 = sphi 0, %s89
      %s93 = sphi 0, %s92
      %s109 = sphi 0, %s93
    $region4: #{tpu_custom_call.1} parent=1 // loop_header_branch
      %14 = sbr.rel (%p12) target = $region8
    $region5: #{tpu_custom_call.1} parent=1 // loop_body
      %s16 = ssub.s32 %s11, 1
      %s17 = ssub.s32 %s11, 2
      %s24 = sadd.s32 1, %s19
      %p25 = scmp.ge.s32.totalorder %s24, 1
      %s26 = scalar_select %p25, 0, %s24
      %s27 = sadd.s32 1, %s18
      %s28 = scalar_select %p25, %s27, %s18
      %p29 = scmp.ge.s32.totalorder %s28, 2
      %s30 = scalar_select %p29, 0, %s28
      %s31 = ssub.s32 %s18, %s30
      %s32 = ssub.s32 %s19, %s26
      %s33 = sor.u32 %s31, %s32
      %p34 = scmp.eq.s32.totalorder %s33, 0
      %s36 = sadd.s32 %s35, 1
      %s37 = scalar_select %p34, %s35, %s36
      %p40 = pneg %p34
      %p41 = scmp.eq.s32.totalorder %s11, 1
      %p42 = por %p40, %p41
      %p43 = scmp.ne.s32.totalorder %s35, %s38
      %p44 = scmp.eq.s32.totalorder %s11, 0
      %p45 = por %p43, %p44
      %p46 = scmp.ne.s32.totalorder %s35, %s38
      %p47 = scmp.eq.s32.totalorder %s16, 1
      %p48 = por %p46, %p47
      %p49 = scmp.ne.s32.totalorder %s38, %s39
      %p50 = scmp.eq.s32.totalorder %s16, 0
      %p51 = por %p49, %p50
      %p52 = scmp.ne.s32.totalorder %s38, %s39
      %p53 = scmp.eq.s32.totalorder %s17, 1
      %p54 = por %p52, %p53
      %p56 = scmp.ne.s32.totalorder %s39, %s55
      %p57 = scmp.eq.s32.totalorder %s17, 0
      %p58 = por %p56, %p57
      %s59 = ssub.s32 %s18, %s30
      %s60 = ssub.s32 %s19, %s26
      %s61 = sor.u32 %s59, %s60
      %p62 = scmp.eq.s32.totalorder %s61, 0
      %s64 = sadd.s32 %s63, 1
      %s65 = scalar_select %p62, %s63, %s64
      %p68 = pneg %p62
      %p69 = scmp.eq.s32.totalorder %s11, 1
      %p70 = por %p68, %p69
      %p71 = scmp.ne.s32.totalorder %s63, %s66
      %p72 = scmp.eq.s32.totalorder %s11, 0
      %p73 = por %p71, %p72
      %p74 = scmp.ne.s32.totalorder %s63, %s66
      %p75 = scmp.eq.s32.totalorder %s16, 1
      %p76 = por %p74, %p75
      %p77 = scmp.ne.s32.totalorder %s66, %s67
      %p78 = scmp.eq.s32.totalorder %s16, 0
      %p79 = por %p77, %p78
      %p80 = scmp.ne.s32.totalorder %s66, %s67
      %p81 = scmp.eq.s32.totalorder %s17, 1
      %p82 = por %p80, %p81
      %p84 = scmp.ne.s32.totalorder %s67, %s83
      %p85 = scmp.eq.s32.totalorder %s17, 0
      %p86 = por %p84, %p85
      %s87 = ssub.s32 %s18, %s30
      %p88 = scmp.eq.s32.totalorder %s87, 0
      %s90 = sadd.s32 %s89, 1
      %s91 = scalar_select %p88, %s89, %s90
      %p94 = pneg %p88
      %p95 = scmp.eq.s32.totalorder %s11, 1
      %p96 = por %p94, %p95
      %p97 = scmp.ne.s32.totalorder %s89, %s92
      %p98 = scmp.eq.s32.totalorder %s11, 0
      %p99 = por %p97, %p98
      %p100 = scmp.ne.s32.totalorder %s89, %s92
      %p101 = scmp.eq.s32.totalorder %s16, 1
      %p102 = por %p100, %p101
      %p103 = scmp.ne.s32.totalorder %s92, %s93
      %p104 = scmp.eq.s32.totalorder %s16, 0
      %p105 = por %p103, %p104
      %p106 = scmp.ne.s32.totalorder %s92, %s93
      %p107 = scmp.eq.s32.totalorder %s17, 1
      %p108 = por %p106, %p107
      %p110 = scmp.ne.s32.totalorder %s93, %s109
      %p111 = scmp.eq.s32.totalorder %s17, 0
      %p112 = por %p110, %p111
      %p113 = scmp.le.s32.totalorder 1, %s11
      %p114 = scmp.lt.s32.totalorder %s11, 3
      %p115 = pnand %p113, %p114
      %p116 = pneg %p115
      // Predicated region
      $region9: #{tpu_custom_call.1} parent=5 // pred_check
        _
      $region10: #{tpu_custom_call.1} parent=5 // pred_check_branch
        %118 = sbr.rel (%p115) target = $region12
      $region11: #{tpu_custom_call.1} parent=5 // pred_region
        %s119 = ssub.s32 %s11, 1
      $region12: #{tpu_custom_call.1} parent=5 // pred_fallthru
        _
      %p120 = scmp.lt.s32.totalorder %s11, 2
      // Predicated region
      $region13: #{tpu_custom_call.1} parent=5 // pred_check
        %p121 = pneg %p120
      $region14: #{tpu_custom_call.1} parent=5 // pred_check_branch
        %123 = sbr.rel (%p121) target = $region16
      $region15: #{tpu_custom_call.1} parent=5 // pred_region
        // Predicated region
        $region17: #{tpu_custom_call.1} parent=15 // pred_check
          %p124 = pneg %p45
        $region18: #{tpu_custom_call.1} parent=15 // pred_check_branch
          %126 = sbr.rel (%p124) target = $region20
        $region19: #{tpu_custom_call.1} parent=15 // pred_region
          %s127 = smul.u32 2, %s19
          %p128 = scmp.lt.s32.totalorder %s18, 1
          %s129 = scalar_select %p128, %s18, 1
          %p130 = scmp.lt.s32.totalorder %s127, 1
          %s131 = scalar_select %p130, %s127, 1
          %s132 = smul.addr %s129, 2
          %s133 = sadd.s32 %s131, %s132
          %s134 = smul.addr %s133, 8
          %s135 = scalar_lea.vmem %s0, %s134
          %s136 = smul.u32 2, %s19
        $region20: #{tpu_custom_call.1} parent=15 // pred_fallthru
          _
        // Predicated region
        $region21: #{tpu_custom_call.1} parent=15 // pred_check
          %p137 = pneg %p73
        $region22: #{tpu_custom_call.1} parent=15 // pred_check_branch
          %139 = sbr.rel (%p137) target = $region24
        $region23: #{tpu_custom_call.1} parent=15 // pred_region
          %s140 = smul.u32 2, %s19
          %p141 = scmp.lt.s32.totalorder %s18, 1
          %s142 = scalar_select %p141, %s18, 1
          %p143 = scmp.lt.s32.totalorder %s140, 1
          %s144 = scalar_select %p143, %s140, 1
          %s145 = smul.addr %s142, 2
          %s146 = sadd.s32 %s144, %s145
          %s147 = smul.addr %s146, 8
          %s148 = scalar_lea.vmem %s1, %s147
          %s149 = smul.u32 2, %s19
        $region24: #{tpu_custom_call.1} parent=15 // pred_fallthru
          _
      $region16: #{tpu_custom_call.1} parent=5 // pred_fallthru
        _
      %p150 = scmp.le.s32.totalorder 1, %s11
      %p151 = scmp.lt.s32.totalorder %s11, 3
      %p152 = pnand %p150, %p151
      %p153 = pneg %p152
      // Predicated region
      $region25: #{tpu_custom_call.1} parent=5 // pred_check
        _
      $region26: #{tpu_custom_call.1} parent=5 // pred_check_branch
        %155 = sbr.rel (%p152) target = $region28
      $region27: #{tpu_custom_call.1} parent=5 // pred_region
        %s156 = ssub.s32 %s11, 1
        %s157 = smul.u32 2, %s21
        %p158 = scmp.lt.s32.totalorder %s20, 1
        %s159 = scalar_select %p158, %s20, 1
        %p160 = scmp.lt.s32.totalorder %s157, 1
        %s161 = scalar_select %p160, %s157, 1
        %s162 = smul.addr %s159, 2
        %s163 = sadd.s32 %s161, %s162
        %s164 = smul.addr %s163, 8
        %s165 = scalar_lea.vmem %s0, %s164
        %p166 = pneg %p51
        %p167 = pneg %p48
        %s168 = smul.u32 2, %s21
        %p169 = scmp.lt.s32.totalorder %s20, 1
        %s170 = scalar_select %p169, %s20, 1
        %p171 = scmp.lt.s32.totalorder %s168, 1
        %s172 = scalar_select %p171, %s168, 1
        %s173 = smul.addr %s170, 2
        %s174 = sadd.s32 %s172, %s173
        %s175 = smul.addr %s174, 8
        %s176 = scalar_lea.vmem %s1, %s175
        %p177 = pneg %p79
        %p178 = pneg %p76
        %p179 = pneg %p105
        %p180 = pneg %p102
        %s181 = sand.u32 %s92, 1
        %s182 = scalar_lea.sflag [#allocation3], %s181
        %s183 = sand.u32 %s92, 1
        %s184 = scalar_lea.vmem [#allocation2], %s183
        %s185 = smul.u32 2, %s21
        %p186 = scmp.lt.s32.totalorder %s20, 1
        %s187 = scalar_select %p186, %s20, 1
        %p188 = scmp.lt.s32.totalorder %s185, 1
        %s189 = scalar_select %p188, %s185, 1
        %s190 = smul.addr %s187, 2
        %s191 = sadd.s32 %s189, %s190
        %s192 = smul.addr %s191, 8
        %s193 = scalar_lea.vmem %s0, %s192
        %s194 = smul.u32 2, %s21
        %s195 = smul.u32 2, %s21
        %p196 = scmp.lt.s32.totalorder %s20, 1
        %s197 = scalar_select %p196, %s20, 1
        %p198 = scmp.lt.s32.totalorder %s195, 1
        %s199 = scalar_select %p198, %s195, 1
        %s200 = smul.addr %s197, 2
        %s201 = sadd.s32 %s199, %s200
        %s202 = smul.addr %s201, 8
        %s203 = scalar_lea.vmem %s1, %s202
        %s204 = smul.u32 2, %s21
        %v205 = vld [vmem:[%s193] sm:$0xff]
        %v206 = vld [vmem:[%s193 + $0x8] sm:$0xff]
        %v207 = vld [vmem:[%s203] sm:$0x3f]
        %v208 = vld [vmem:[%s203 + $0x8] sm:$0x3f]
        %v209 = vrot.slane %v205, 4
        %v210 = vmax.f32 %v205, %v209
        %v211 = vrot.slane %v210, 2
        %v212 = vmax.f32 %v210, %v211
        %v213 = vrot.slane %v212, 1
        %v214 = vmax.f32 %v212, %v213
        %v215 = vrot.slane %v206, 4
        %v216 = vmax.f32 %v206, %v215
        %v217 = vrot.slane %v216, 2
        %v218 = vmax.f32 %v216, %v217
        %v219 = vrot.slane %v218, 1
        %v220 = vmax.f32 %v218, %v219
        %v221 = vsub.f32 %v205, %v214
        %v222 = vsub.f32 %v206, %v220
        %v223 = vmul.f32 %v221, 1.442695
        %v224 = vpow.pop %v223
        %v225 = vmul.f32 %v222, 1.442695
        %v226 = vpow.pop %v225
        %v227 = vrot.slane %v224, 4
        %v228 = vadd.f32 %v224, %v227
        %v229 = vrot.slane %v228, 2
        %v230 = vadd.f32 %v228, %v229
        %v231 = vrot.slane %v230, 1
        %v232 = vadd.f32 %v230, %v231
        %v233 = vrot.slane %v226, 4
        %v234 = vadd.f32 %v226, %v233
        %v235 = vrot.slane %v234, 2
        %v236 = vadd.f32 %v234, %v235
        %v237 = vrot.slane %v236, 1
        %v238 = vadd.f32 %v236, %v237
        %v239 = vlog2.pop %v232
        %v240 = vmul.f32 %v239, 0.6931472
        %v241 = vlog2.pop %v238
        %v242 = vmul.f32 %v241, 0.6931472
        %v243 = vlaneseq
        %v244 = vshrl.u32 %v243, 7
        %vm245 = vcmp.eq.s32.totalorder %v244, 0
        %vm246 = vcmp.ge.s32.totalorder %v244, 6
        %vm247 = vmor %vm245, %vm246
        %v248 = vsel %vm247, 1, 0
        %vm249 = vcmp.eq.s32.totalorder %v248, 1
        %v250 = vsel %vm249, %v224, 0.0
        %v251 = vsel %vm249, %v226, 0.0
        %v252 = vrot.slane %v250, 4
        %v253 = vadd.f32 %v250, %v252
        %v254 = vrot.slane %v253, 2
        %v255 = vadd.f32 %v253, %v254
        %v256 = vrot.slane %v255, 1
        %v257 = vadd.f32 %v255, %v256
        %v258 = vrot.slane %v251, 4
        %v259 = vadd.f32 %v251, %v258
        %v260 = vrot.slane %v259, 2
        %v261 = vadd.f32 %v259, %v260
        %v262 = vrot.slane %v261, 1
        %v263 = vadd.f32 %v261, %v262
        %v264 = vmax.f32 %v257, 1.1754944e-38
        %v265 = vmax.f32 %v263, 1.1754944e-38
        %v266 = vlog2.pop %v264
        %v267 = vmul.f32 %v266, 0.6931472
        %v268 = vlog2.pop %v265
        %v269 = vmul.f32 %v268, 0.6931472
        %v270 = vsub.f32 %v267, %v240
        %v271 = vsub.f32 %v269, %v242
        %vm272 = vcmask 1045504
        %v273 = vsel %vm272, %v207, -inf
        %v274 = vrot.slane %v273, 4
        %v275 = vmax.f32 %v273, %v274
        %v276 = vrot.slane %v275, 2
        %v277 = vmax.f32 %v275, %v276
        %v278 = vrot.slane %v277, 1
        %v279 = vmax.f32 %v277, %v278
        %v280 = vsel %vm272, %v208, -inf
        %v281 = vrot.slane %v280, 4
        %v282 = vmax.f32 %v280, %v281
        %v283 = vrot.slane %v282, 2
        %v284 = vmax.f32 %v282, %v283
        %v285 = vrot.slane %v284, 1
        %v286 = vmax.f32 %v284, %v285
        %v287 = vsub.f32 %v207, %v279
        %v288 = vsub.f32 %v208, %v286
        %v289 = vmul.f32 %v287, 1.442695
        %v290 = vpow.pop %v289
        %v291 = vmul.f32 %v288, 1.442695
        %v292 = vpow.pop %v291
        %v293 = vsel %vm272, %v290, 0.0
        %v294 = vrot.slane %v293, 4
        %v295 = vadd.f32 %v293, %v294
        %v296 = vrot.slane %v295, 2
        %v297 = vadd.f32 %v295, %v296
        %v298 = vrot.slane %v297, 1
        %v299 = vadd.f32 %v297, %v298
        %v300 = vsel %vm272, %v292, 0.0
        %v301 = vrot.slane %v300, 4
        %v302 = vadd.f32 %v300, %v301
        %v303 = vrot.slane %v302, 2
        %v304 = vadd.f32 %v302, %v303
        %v305 = vrot.slane %v304, 1
        %v306 = vadd.f32 %v304, %v305
        %v307 = vadd.f32 %v214, %v240
        %v308 = vadd.f32 %v220, %v242
        %v309 = vsub.f32 %v205, %v307
        %v310 = vsub.f32 %v206, %v308
        %v311 = vmul.f32 %v290, %v309
        %v312 = vmul.f32 %v292, %v310
        %v313 = vsel %vm272, %v311, 0.0
        %v314 = vrot.slane %v313, 4
        %v315 = vadd.f32 %v313, %v314
        %v316 = vrot.slane %v315, 2
        %v317 = vadd.f32 %v315, %v316
        %v318 = vrot.slane %v317, 1
        %v319 = vadd.f32 %v317, %v318
        %v320 = vsel %vm272, %v312, 0.0
        %v321 = vrot.slane %v320, 4
        %v322 = vadd.f32 %v320, %v321
        %v323 = vrot.slane %v322, 2
        %v324 = vadd.f32 %v322, %v323
        %v325 = vrot.slane %v324, 1
        %v326 = vadd.f32 %v324, %v325
        %v327 = vsub.f32 %v270, %v309
        %v328 = vsub.f32 %v271, %v310
        %v329 = vmul.f32 %v290, %v327
        %v330 = vmul.f32 %v292, %v328
        %v331 = vadd.f32 %v329, %v319
        %v332 = vadd.f32 %v330, %v326
        %v333 = vrcp.pop %v299
        %v334 = vrcp.pop %v306
        %v335 = vmul.f32 %v331, %v333
        %v336 = vmul.f32 %v332, %v334
        %v337 = vmul.f32 %v335, 0.16666667
        %v338 = vmul.f32 %v336, 0.16666667
        %vm339 = vcmask 1040384
        %v340 = vsel %vm339, %v337, 0.0
        %v341 = vsel %vm339, %v338, 0.0
        %v342 = vadd.f32 %v340, %v341
        %343 = vadd.xlane.f32.xlu0 %v342
        %v344 = vpop.xlane.xlu0 %343
        %v345 = vlaneseq
        %v346 = vand.u32 %v345, 127
        %vm347 = vcmp.eq.s32.totalorder %v346, 0
        %v348 = vsel %vm347, %v344, 0.0
        %p349 = scmp.eq.s32.totalorder %s21, 0
        // Predicated region
        $region29: #{tpu_custom_call.1} parent=27 // pred_check
          %p350 = pneg %p349
        $region30: #{tpu_custom_call.1} parent=27 // pred_check_branch
          %352 = sbr.rel (%p350) target = $region32
        $region31: #{tpu_custom_call.1} parent=27 // pred_region
          %353 = vst [vmem:[%s184] sm:$0x1] 0.0
        $region32: #{tpu_custom_call.1} parent=27 // pred_fallthru
          _
        %v354 = vld [vmem:[%s184] sm:$0x1]
        %v355 = vadd.f32 %v354, %v348
        %356 = vst [vmem:[%s184] sm:$0x1] %v355
        %s357 = sand.u32 %s92, 1
        %s358 = scalar_lea.sflag [#allocation3], %s357
        %s359 = sand.u32 %s92, 1
        %s360 = scalar_lea.vmem [#allocation2], %s359
        // Predicated region
        $region33: #{tpu_custom_call.1} parent=27 // pred_check
          %p361 = pneg %p102
        $region34: #{tpu_custom_call.1} parent=27 // pred_check_branch
          %363 = sbr.rel (%p361) target = $region36
        $region35: #{tpu_custom_call.1} parent=27 // pred_region
          %s365 = ssub.s32 16, 16
          %366 = vsyncadd %s358, %s365
          %s367 = smul.addr %s20, 16
          %s368 = scalar_lea.hbm %s2, %s367
          %s370 = sshll.u32 %s360, 4
          %s371 = int_to_ptr.vmem [resolvable:$true] %s370
          %373 = dma.vmem_to_hbm [thread:$0]  %s371, 16, %s368, %s358
        $region36: #{tpu_custom_call.1} parent=27 // pred_fallthru
          _
      $region28: #{tpu_custom_call.1} parent=5 // pred_fallthru
        _
      %p374 = scmp.le.s32.totalorder 2, %s11
      // Predicated region
      $region37: #{tpu_custom_call.1} parent=5 // pred_check
        %p375 = pneg %p374
      $region38: #{tpu_custom_call.1} parent=5 // pred_check_branch
        %377 = sbr.rel (%p375) target = $region40
      $region39: #{tpu_custom_call.1} parent=5 // pred_region
        %s378 = ssub.s32 %s11, 2
        // Predicated region
        $region41: #{tpu_custom_call.1} parent=39 // pred_check
          %p379 = pneg %p108
        $region42: #{tpu_custom_call.1} parent=39 // pred_check_branch
          %381 = sbr.rel (%p379) target = $region44
        $region43: #{tpu_custom_call.1} parent=39 // pred_region
          %s382 = sand.u32 %s93, 1
          %s383 = scalar_lea.sflag [#allocation3], %s382
          %s384 = sand.u32 %s93, 1
          %s385 = scalar_lea.vmem [#allocation2], %s384
          %386 = dma.done %s383, 16
        $region44: #{tpu_custom_call.1} parent=39 // pred_fallthru
          _
      $region40: #{tpu_custom_call.1} parent=5 // pred_fallthru
        _
    $region6: #{tpu_custom_call.1} parent=1 // loop_footer
      %s15 = sadd.s32 1, %s11
    $region7: #{tpu_custom_call.1} parent=1 // loop_footer_branch
      %10 = sbr.rel target = $region3
    $region8: #{tpu_custom_call.1} parent=1 // loop_exit
      _
    %387 = vsyncpa [#allocation3], 1
    %s388 = scalar_lea.sflag [#allocation3], 1
    %389 = vsyncpa %s388, 1

</llo_original>
